<compile_context>
chip_gen: v5e
topology: v5e:2x2
jax: 0.10.0
libtpu: 0.0.40
codegen_flags: <defaults>
</compile_context>

<pallas_src>
import abc
import functools

import jax
import jax.numpy as jnp
from jax.experimental import pallas as pl
from jax.experimental.pallas import tpu as pltpu


def _query_vmem_limit_bytes():
    """Generation-aware scoped-VMEM budget (~3/4 of physical per TensorCore)."""
    try:
        cap = int(pltpu.get_tpu_info().vmem_capacity_bytes)
        return int(min(cap * 3 // 4, 112 * 1024 * 1024))
    except Exception:  # noqa: BLE001 - fall back to a safe budget everywhere.
        return 32 * 1024 * 1024


_VMEM_LIMIT_BYTES = _query_vmem_limit_bytes()
_LARGE_VMEM = _VMEM_LIMIT_BYTES >= 64 * 1024 * 1024   # v5e/v6e(128 MiB) vs v7x(64 MiB)

_TM_MAX = 512 if _LARGE_VMEM else 256
_FEAT_TILES = (1024, 512, 256, 128) if _LARGE_VMEM else (512, 256, 128)


def _round_up(x, m):
    return ((x + m - 1) // m) * m


def _pick_feat_tile(dim, candidates=_FEAT_TILES):
    """Largest lane-dense candidate tile that evenly divides `dim`, else full dim."""
    for c in candidates:
        if dim >= c and dim % c == 0:
            return c
    return dim


def _batch_tiling(b):
    """Batch tile (multiple of 8, targeting the MXU row width) and padded batch."""
    tm = min(_TM_MAX, _round_up(max(b, 1), 8))
    return tm, _round_up(b, tm)


def _pad_rows(a, rows):
    if a.shape[0] == rows:
        return a
    return jnp.pad(a, ((0, rows - a.shape[0]), (0, 0)))


# ----------------------------------------------------------------------------
# Fused encode -> decode kernel: grid (batch tiles, hidden tiles)
#   - hidden activation bounded to (tm, th) per step, never round-trips HBM
#   - only (Din x th) + (th x Dout) weight tiles VMEM-resident per step
# ----------------------------------------------------------------------------
def _fused_fwd_kernel(x_ref, we_ref, be_ref, wd_ref, bd_ref, o_ref, acc_ref):
    k = pl.program_id(1)

    @pl.when(k == 0)
    def _():
        acc_ref[...] = jnp.zeros_like(acc_ref)

    h = jnp.dot(x_ref[...], we_ref[...], preferred_element_type=jnp.float32)
    h = h + be_ref[...]
    # Intentional cast of the second-matmul LHS to the weight/compute dtype
    # (no-op for f32 weights; enables the bf16 MXU path). Accumulation stays f32.
    acc_ref[...] += jnp.dot(h.astype(wd_ref.dtype), wd_ref[...],
                            preferred_element_type=jnp.float32)

    @pl.when(k == pl.num_programs(1) - 1)
    def _():
        o_ref[...] = (acc_ref[...] + bd_ref[...]).astype(o_ref.dtype)


def pallas_fused_fwd(x, w_enc, b_enc, w_dec, b_dec):
    """(x @ W_enc + b_enc) @ W_dec + b_dec in one kernel launch."""
    B, Din = x.shape
    Dh = w_enc.shape[1]
    Dout = w_dec.shape[1]
    tm, Bp = _batch_tiling(B)
    th = _pick_feat_tile(Dh)
    xp = _pad_rows(x, Bp)
    gm, gk = Bp // tm, Dh // th
    # TODO(synk): for very large Din, add a third grid axis (or emit_pipeline)
    # over Din so the (Din x th) W_enc tile and (tm x Din) x tile shrink too.

    itemsize = x.dtype.itemsize
    flops = int(2 * Bp * Din * Dh + 2 * Bp * Dh * Dout)
    bytes_accessed = int(
        itemsize * (Bp * Din + gm * (Din * Dh + Dh + Dh * Dout) + Bp * Dout)
        + b_dec.dtype.itemsize * Dout)

    out = pl.pallas_call(
        _fused_fwd_kernel,
        out_shape=jax.ShapeDtypeStruct((Bp, Dout), x.dtype),
        grid_spec=pltpu.PrefetchScalarGridSpec(
            num_scalar_prefetch=0,
            grid=(gm, gk),
            in_specs=[
                pl.BlockSpec((tm, Din), lambda i, k: (i, 0)),
                pl.BlockSpec((Din, th), lambda i, k: (0, k)),
                pl.BlockSpec((1, th), lambda i, k: (0, k)),
                pl.BlockSpec((th, Dout), lambda i, k: (k, 0)),
                pl.BlockSpec((1, Dout), lambda i, k: (0, 0)),
            ],
            out_specs=pl.BlockSpec((tm, Dout), lambda i, k: (i, 0)),
            scratch_shapes=[pltpu.VMEM((tm, Dout), jnp.float32)],
        ),
        compiler_params=pltpu.CompilerParams(
            dimension_semantics=("parallel", "arbitrary"),
            vmem_limit_bytes=_VMEM_LIMIT_BYTES,
        ),
        cost_estimate=pl.CostEstimate(
            flops=flops, transcendentals=0, bytes_accessed=bytes_accessed),
    )(xp, w_enc, b_enc, w_dec, b_dec)
    return out[:B] if Bp != B else out


# ----------------------------------------------------------------------------
# Fused encode -> decode -> MSE kernel (learn path)
#   - batch axis is "parallel" (megacore friendly): each batch tile emits a
#     lane-dense (8, Dout) partial sum; the scalar mean is a tiny trailing sum.
#   - steady-state loop is pure MXU + bias add; the only reduce work (VPU-only
#     sublane-group folds) happens once in the k==last epilogue.
# ----------------------------------------------------------------------------
def _fused_learn_kernel(x_ref, t_ref, we_ref, be_ref, wd_ref, bd_ref,
                        part_ref, acc_ref, *, batch, tm):
    i = pl.program_id(0)
    k = pl.program_id(1)

    @pl.when(k == 0)
    def _():
        acc_ref[...] = jnp.zeros_like(acc_ref)

    h = jnp.dot(x_ref[...], we_ref[...], preferred_element_type=jnp.float32)
    h = h + be_ref[...]
    acc_ref[...] += jnp.dot(h.astype(wd_ref.dtype), wd_ref[...],
                            preferred_element_type=jnp.float32)

    @pl.when(k == pl.num_programs(1) - 1)
    def _():
        y = acc_ref[...] + bd_ref[...]
        d = y - t_ref[...].astype(jnp.float32)
        # Padded batch rows contribute nothing to the loss.
        row = jax.lax.broadcasted_iota(jnp.int32, d.shape, 0) + i * tm
        d = jnp.where(row < batch, d, 0.0)
        dd = d * d
        # Fold sublane groups of 8 with plain vreg adds (no cross-lane XLU work);
        # final scalar reduce happens once outside the kernel.
        part_ref[...] = dd.reshape(tm // 8, 8, dd.shape[-1]).sum(axis=0)


def pallas_fused_learn(x, target, w_enc, b_enc, w_dec, b_dec):
    """MSE( (x @ W_enc + b_enc) @ W_dec + b_dec , target ) -> scalar f32."""
    B, Din = x.shape
    Dh = w_enc.shape[1]
    Dout = w_dec.shape[1]
    tm, Bp = _batch_tiling(B)
    th = _pick_feat_tile(Dh)
    xp = _pad_rows(x, Bp)
    tp = _pad_rows(target, Bp)
    gm, gk = Bp // tm, Dh // th

    itemsize = x.dtype.itemsize
    flops = int(2 * Bp * Din * Dh + 2 * Bp * Dh * Dout + 3 * Bp * Dout)
    bytes_accessed = int(
        itemsize * (Bp * Din + gm * (Din * Dh + Dh + Dh * Dout))
        + target.dtype.itemsize * Bp * Dout
        + 4 * (Dout + gm * 8 * Dout))

    partials = pl.pallas_call(
        functools.partial(_fused_learn_kernel, batch=B, tm=tm),
        out_shape=jax.ShapeDtypeStruct((gm * 8, Dout), jnp.float32),
        grid_spec=pltpu.PrefetchScalarGridSpec(
            num_scalar_prefetch=0,
            grid=(gm, gk),
            in_specs=[
                pl.BlockSpec((tm, Din), lambda i, k: (i, 0)),
                pl.BlockSpec((tm, Dout), lambda i, k: (i, 0)),
                pl.BlockSpec((Din, th), lambda i, k: (0, k)),
                pl.BlockSpec((1, th), lambda i, k: (0, k)),
                pl.BlockSpec((th, Dout), lambda i, k: (k, 0)),
                pl.BlockSpec((1, Dout), lambda i, k: (0, 0)),
            ],
            out_specs=pl.BlockSpec((8, Dout), lambda i, k: (i, 0)),
            scratch_shapes=[pltpu.VMEM((tm, Dout), jnp.float32)],
        ),
        compiler_params=pltpu.CompilerParams(
            dimension_semantics=("parallel", "arbitrary"),
            vmem_limit_bytes=_VMEM_LIMIT_BYTES,
        ),
        cost_estimate=pl.CostEstimate(
            flops=flops, transcendentals=0, bytes_accessed=bytes_accessed),
    )(xp, tp, w_enc, b_enc, w_dec, b_dec)
    # Tiny trailing reduction over the lane-dense per-tile partials.
    return jnp.sum(partials) / (B * Dout)


# ----------------------------------------------------------------------------
# Standalone tiled linear (fwd_encode / fwd_decode dispatch modes)
# ----------------------------------------------------------------------------
def _linear_tiled_kernel(x_ref, w_ref, b_ref, o_ref, acc_ref):
    k = pl.program_id(2)

    @pl.when(k == 0)
    def _():
        acc_ref[...] = jnp.zeros_like(acc_ref)

    acc_ref[...] += jnp.dot(x_ref[...], w_ref[...],
                            preferred_element_type=jnp.float32)

    @pl.when(k == pl.num_programs(2) - 1)
    def _():
        # Bias added once, in the epilogue only (keeps the K loop pure MXU work).
        o_ref[...] = (acc_ref[...] + b_ref[...]).astype(o_ref.dtype)


def pallas_linear(x, w, b):
    """x: [B, K] @ w: [K, N] + b: [1, N] -> [B, N], tiled (M, N, K) grid."""
    B, K = x.shape
    N = w.shape[1]
    tm, Bp = _batch_tiling(B)
    tn = _pick_feat_tile(N)
    tk = _pick_feat_tile(K)
    xp = _pad_rows(x, Bp)
    gm, gn, gk = Bp // tm, N // tn, K // tk

    itemsize = x.dtype.itemsize
    flops = int(2 * Bp * K * N)
    # Account for tiling re-reads: x streamed gn times, w (and bias) gm times.
    bytes_accessed = int(itemsize * (Bp * K * gn + K * N * gm + Bp * N)
                         + b.dtype.itemsize * N * gm)

    out = pl.pallas_call(
        _linear_tiled_kernel,
        out_shape=jax.ShapeDtypeStruct((Bp, N), x.dtype),
        grid_spec=pltpu.PrefetchScalarGridSpec(
            num_scalar_prefetch=0,
            grid=(gm, gn, gk),
            in_specs=[
                pl.BlockSpec((tm, tk), lambda i, j, k: (i, k)),
                pl.BlockSpec((tk, tn), lambda i, j, k: (k, j)),
                pl.BlockSpec((1, tn), lambda i, j, k: (0, j)),
            ],
            out_specs=pl.BlockSpec((tm, tn), lambda i, j, k: (i, j)),
            scratch_shapes=[pltpu.VMEM((tm, tn), jnp.float32)],
        ),
        compiler_params=pltpu.CompilerParams(
            dimension_semantics=("parallel", "parallel", "arbitrary"),
            vmem_limit_bytes=_VMEM_LIMIT_BYTES,
        ),
        cost_estimate=pl.CostEstimate(
            flops=flops, transcendentals=0, bytes_accessed=bytes_accessed),
    )(xp, w, b)
    return out[:B] if Bp != B else out


# ----------------------------------------------------------------------------
# Dispatching module (exact dispatch semantics of the PyTorch reference)
# ----------------------------------------------------------------------------
class DispatchingModule(metaclass=abc.ABCMeta):
    def forward(self, mode, **kwargs):
        """Forward function with different forward modes."""
        if mode == 'fwd':
            return self.fwd(**kwargs)
        if mode == 'fwd_encode':
            return self.fwd_encode(**kwargs)
        if mode == 'fwd_decode':
            return self.fwd_decode(**kwargs)
        elif mode == 'learn':
            return self.learn(**kwargs)
        elif mode == 'generate':
            return self.generate(**kwargs)
        else:
            raise Exception('Unknown mode: %s' % mode)

    # Abstract methods — no concrete compute defined in the reference module.
    @abc.abstractmethod
    def fwd(self, **kwargs):
        raise NotImplementedError

    @abc.abstractmethod
    def fwd_encode(self, **kwargs):
        raise NotImplementedError

    @abc.abstractmethod
    def fwd_decode(self, **kwargs):
        raise NotImplementedError

    @abc.abstractmethod
    def learn(self, **kwargs):
        raise NotImplementedError

    @abc.abstractmethod
    def generate(self, **kwargs):
        raise NotImplementedError


class DemoModule(DispatchingModule):
    """Minimal concrete subclass: hot paths run in Pallas kernels.

    f32 master weights; `compute_dtype=jnp.bfloat16` casts x / W_enc / W_dec at
    the call boundary (biases stay f32, MXU accumulation stays f32).
    """

    def __init__(self, d_in, d_hidden, d_out, key, compute_dtype=jnp.float32):
        k1, k2 = jax.random.split(key, 2)
        self.compute_dtype = compute_dtype
        self.w_enc = jax.random.normal(k1, (d_in, d_hidden), jnp.float32) * 0.02
        self.b_enc = jnp.zeros((1, d_hidden), jnp.float32)
        self.w_dec = jax.random.normal(k2, (d_hidden, d_out), jnp.float32) * 0.02
        self.b_dec = jnp.zeros((1, d_out), jnp.float32)

    def _cast(self, a):
        return a.astype(self.compute_dtype)

    def fwd_encode(self, x):
        return pallas_linear(self._cast(x), self._cast(self.w_enc), self.b_enc)

    def fwd_decode(self, h):
        return pallas_linear(self._cast(h), self._cast(self.w_dec), self.b_dec)

    def fwd(self, x):
        # Fused encode + decode: hidden activation never hits HBM.
        return pallas_fused_fwd(self._cast(x), self._cast(self.w_enc), self.b_enc,
                                self._cast(self.w_dec), self.b_dec)

    def learn(self, x, target):
        # Fused encode + decode + MSE with batch-parallel partial reduction.
        return pallas_fused_learn(self._cast(x), target, self._cast(self.w_enc),
                                  self.b_enc, self._cast(self.w_dec), self.b_dec)

    def generate(self, x):
        return self.fwd(x)


# ----------------------------------------------------------------------------
if __name__ == "__main__":
    key = jax.random.PRNGKey(0)
    k_param, k_x, k_t, k_x2, k_t2 = jax.random.split(key, 5)

    # Small but lane-dense shapes: batch multiple of 8, features multiple of 128.
    batch, d_in, d_hidden, d_out = 8, 128, 128, 128
    x = jax.random.normal(k_x, (batch, d_in), jnp.float32)
    target = jax.random.normal(k_t, (batch, d_out), jnp.float32)

    module = DemoModule(d_in, d_hidden, d_out, k_param)

    # Exercise every dispatch mode exactly as the PyTorch forward() would.
    y_fwd = module.forward('fwd', x=x)
    h_enc = module.forward('fwd_encode', x=x)
    y_dec = module.forward('fwd_decode', h=h_enc)
    loss = module.forward('learn', x=x, target=target)
    y_gen = module.forward('generate', x=x)

    # Unknown-mode path must raise, same as the reference.
    try:
        module.forward('not_a_mode')
        raise SystemExit("expected Unknown mode exception")
    except Exception as e:  # noqa: BLE001
        assert 'Unknown mode' in str(e)

    # Ragged (non-multiple-of-8) batch exercises the pad + mask path.
    batch_odd = 20
    x_odd = jax.random.normal(k_x2, (batch_odd, d_in), jnp.float32)
    t_odd = jax.random.normal(k_t2, (batch_odd, d_out), jnp.float32)
    y_odd = module.forward('fwd', x=x_odd)
    loss_odd = module.forward('learn', x=x_odd, target=t_odd)

    # bf16 compute path (f32 master weights).
    module16 = DemoModule(d_in, d_hidden, d_out, k_param,
                          compute_dtype=jnp.bfloat16)
    y_bf16 = module16.forward('fwd', x=x)

    jax.block_until_ready((y_fwd, h_enc, y_dec, loss, y_gen,
                           y_odd, loss_odd, y_bf16))

    # Sanity checks against plain-JAX references.
    h_ref = x @ module.w_enc + module.b_enc
    y_ref = h_ref @ module.w_dec + module.b_dec
    loss_ref = jnp.mean((y_ref - target) ** 2)

    assert jnp.allclose(h_enc, h_ref, atol=1e-4, rtol=1e-4)
    assert jnp.allclose(y_dec, h_ref @ module.w_dec + module.b_dec,
                        atol=1e-4, rtol=1e-4)
    assert jnp.allclose(y_fwd, y_ref, atol=1e-4, rtol=1e-4)
    assert jnp.allclose(y_gen, y_ref, atol=1e-4, rtol=1e-4)
    assert jnp.allclose(loss, loss_ref, atol=1e-5, rtol=1e-4)
    assert y_fwd.shape == (batch, d_out)
    assert loss.shape == ()

    y_odd_ref = (x_odd @ module.w_enc + module.b_enc) @ module.w_dec + module.b_dec
    loss_odd_ref = jnp.mean((y_odd_ref - t_odd) ** 2)
    assert y_odd.shape == (batch_odd, d_out)
    assert jnp.allclose(y_odd, y_odd_ref, atol=1e-4, rtol=1e-4)
    assert jnp.allclose(loss_odd, loss_odd_ref, atol=1e-5, rtol=1e-4)

    assert y_bf16.dtype == jnp.bfloat16
    assert jnp.allclose(y_bf16.astype(jnp.float32), y_ref, atol=2e-2, rtol=2e-2)

    print("KERNEL_OK")
</pallas_src>

<mosaic_0001>
module attributes {stable_mosaic.version = 11 : i64} {
  func.func @_fused_fwd_kernel(%arg0: i32, %arg1: i32, %arg2: memref<8x128xf32, #tpu.memory_space<vmem>>, %arg3: memref<128x128xf32, #tpu.memory_space<vmem>>, %arg4: memref<1x128xf32, #tpu.memory_space<vmem>>, %arg5: memref<128x128xf32, #tpu.memory_space<vmem>>, %arg6: memref<1x128xf32, #tpu.memory_space<vmem>>, %arg7: memref<8x128xf32, #tpu.memory_space<vmem>>, %arg8: memref<8x128xf32, #tpu.memory_space<vmem>>) attributes {dimension_semantics = [#tpu.dimension_semantics<parallel>, #tpu.dimension_semantics<arbitrary>], iteration_bounds = array<i64: 1, 1>, scalar_prefetch = 0 : i64, scratch_operands = 1 : i64, tpu.core_type = #tpu.core_type<tc>, window_params = [{transform_indices = @transform_0, window_bounds = array<i64: 8, 128>}, {transform_indices = @transform_1, window_bounds = array<i64: 128, 128>}, {transform_indices = @transform_2, window_bounds = array<i64: 1, 128>}, {transform_indices = @transform_3, window_bounds = array<i64: 128, 128>}, {pipeline_mode = #tpu.pipeline_mode<synchronous>, transform_indices = @transform_4, window_bounds = array<i64: 1, 128>}, {transform_indices = @transform_5, window_bounds = array<i64: 8, 128>}]} {
    %c0_i32 = arith.constant 0 : i32
    %0 = arith.cmpi eq, %arg1, %c0_i32 : i32
    %1 = arith.extui %0 : i1 to i32
    %c0_i32_0 = arith.constant 0 : i32
    %2 = arith.cmpi ne, %1, %c0_i32_0 : i32
    scf.if %2 {
      %cst_15 = arith.constant 0.000000e+00 : f32
      %17 = vector.broadcast %cst_15 : f32 to vector<8x128xf32>
      %c0_16 = arith.constant 0 : index
      %c0_17 = arith.constant 0 : index
      %18 = vector.load %arg8[%c0_16, %c0_17] : memref<8x128xf32, #tpu.memory_space<vmem>>, vector<8x128xf32>
      tpu.vector_store %arg8[%c0_16, %c0_17], %17 {strides = array<i32>} : memref<8x128xf32, #tpu.memory_space<vmem>>, vector<8x128xf32>,
    } else {
    }
    %c0 = arith.constant 0 : index
    %c0_1 = arith.constant 0 : index
    %3 = vector.load %arg2[%c0, %c0_1] : memref<8x128xf32, #tpu.memory_space<vmem>>, vector<8x128xf32>
    %c0_2 = arith.constant 0 : index
    %c0_3 = arith.constant 0 : index
    %4 = vector.load %arg3[%c0_2, %c0_3] : memref<128x128xf32, #tpu.memory_space<vmem>>, vector<128x128xf32>
    %cst = arith.constant dense<0.000000e+00> : vector<8x128xf32>
    %5 = tpu.matmul %3, %4, %cst {dimension_numbers = #tpu.dot_dimension_numbers<[1], [0], [0], [1], [0, 0, 1, 1], [], []>} : vector<8x128xf32>, vector<128x128xf32>, vector<8x128xf32> -> vector<8x128xf32>
    %c0_4 = arith.constant 0 : index
    %c0_5 = arith.constant 0 : index
    %6 = vector.load %arg4[%c0_4, %c0_5] : memref<1x128xf32, #tpu.memory_space<vmem>>, vector<1x128xf32>
    %7 = vector.broadcast %6 : vector<1x128xf32> to vector<8x128xf32>
    %8 = arith.addf %5, %7 : vector<8x128xf32>
    %c0_6 = arith.constant 0 : index
    %c0_7 = arith.constant 0 : index
    %9 = vector.load %arg8[%c0_6, %c0_7] : memref<8x128xf32, #tpu.memory_space<vmem>>, vector<8x128xf32>
    %c0_8 = arith.constant 0 : index
    %c0_9 = arith.constant 0 : index
    %10 = vector.load %arg5[%c0_8, %c0_9] : memref<128x128xf32, #tpu.memory_space<vmem>>, vector<128x128xf32>
    %cst_10 = arith.constant dense<0.000000e+00> : vector<8x128xf32>
    %11 = tpu.matmul %8, %10, %cst_10 {dimension_numbers = #tpu.dot_dimension_numbers<[1], [0], [0], [1], [0, 0, 1, 1], [], []>} : vector<8x128xf32>, vector<128x128xf32>, vector<8x128xf32> -> vector<8x128xf32>
    %12 = arith.addf %9, %11 : vector<8x128xf32>
    %c0_11 = arith.constant 0 : index
    %c0_12 = arith.constant 0 : index
    %13 = vector.load %arg8[%c0_11, %c0_12] : memref<8x128xf32, #tpu.memory_space<vmem>>, vector<8x128xf32>
    tpu.vector_store %arg8[%c0_11, %c0_12], %12 {strides = array<i32>} : memref<8x128xf32, #tpu.memory_space<vmem>>, vector<8x128xf32>,
    %c0_i32_13 = arith.constant 0 : i32
    %14 = arith.cmpi eq, %arg1, %c0_i32_13 : i32
    %15 = arith.extui %14 : i1 to i32
    %c0_i32_14 = arith.constant 0 : i32
    %16 = arith.cmpi ne, %15, %c0_i32_14 : i32
    scf.if %16 {
      %c0_15 = arith.constant 0 : index
      %c0_16 = arith.constant 0 : index
      %17 = vector.load %arg8[%c0_15, %c0_16] : memref<8x128xf32, #tpu.memory_space<vmem>>, vector<8x128xf32>
      %c0_17 = arith.constant 0 : index
      %c0_18 = arith.constant 0 : index
      %18 = vector.load %arg6[%c0_17, %c0_18] : memref<1x128xf32, #tpu.memory_space<vmem>>, vector<1x128xf32>
      %19 = vector.broadcast %18 : vector<1x128xf32> to vector<8x128xf32>
      %20 = arith.addf %17, %19 : vector<8x128xf32>
      %c0_19 = arith.constant 0 : index
      %c0_20 = arith.constant 0 : index
      %21 = vector.load %arg7[%c0_19, %c0_20] : memref<8x128xf32, #tpu.memory_space<vmem>>, vector<8x128xf32>
      tpu.vector_store %arg7[%c0_19, %c0_20], %20 {strides = array<i32>} : memref<8x128xf32, #tpu.memory_space<vmem>>, vector<8x128xf32>,
    } else {
    }
    return
  }
  func.func @transform_0(%arg0: i32, %arg1: i32) -> (i32, i32) {
    %c0_i32 = arith.constant 0 : i32
    %c0_i32_0 = arith.constant 0 : i32
    return %arg0, %c0_i32 : i32, i32
  }
  func.func @transform_1(%arg0: i32, %arg1: i32) -> (i32, i32) {
    %c0_i32 = arith.constant 0 : i32
    %c0_i32_0 = arith.constant 0 : i32
    return %c0_i32, %arg1 : i32, i32
  }
  func.func @transform_2(%arg0: i32, %arg1: i32) -> (i32, i32) {
    %c0_i32 = arith.constant 0 : i32
    %c0_i32_0 = arith.constant 0 : i32
    return %c0_i32, %arg1 : i32, i32
  }
  func.func @transform_3(%arg0: i32, %arg1: i32) -> (i32, i32) {
    %c0_i32 = arith.constant 0 : i32
    %c0_i32_0 = arith.constant 0 : i32
    return %arg1, %c0_i32 : i32, i32
  }
  func.func @transform_4(%arg0: i32, %arg1: i32) -> (i32, i32) {
    %c0_i32 = arith.constant 0 : i32
    %c0_i32_0 = arith.constant 0 : i32
    %c0_i32_1 = arith.constant 0 : i32
    return %c0_i32, %c0_i32_0 : i32, i32
  }
  func.func @transform_5(%arg0: i32, %arg1: i32) -> (i32, i32) {
    %c0_i32 = arith.constant 0 : i32
    %c0_i32_0 = arith.constant 0 : i32
    return %arg0, %c0_i32 : i32, i32
  }
}

</mosaic_0001>

<llo_original>
// kernel: tpu_custom_call.1
$region0: #{tpu_custom_call.1}
  #allocation0 [shape = 'u32[]', space=smem, size = 0x4, offset = 0x4, fixed_abs, tag = 'smem constant byte address 0x4 - core index']
  #allocation1 [shape = 'u32[72,128]{1,0:T(1,128)}', space=vmem, size = 0x9000, scoped, tag = 'internal scratch']
  #allocation2 [shape = 'f32[8,128]{1,0:T(8,128)}', space=vmem, size = 0x1000, scoped, tag = 'scratch operand']
  %s0 = inlined_call_operand.hbm [shape: f32[8,128], index: 0, kind: input, shape index: {}]
  %s1 = inlined_call_operand.hbm [shape: f32[128,128], index: 1, kind: input, shape index: {}]
  %s2 = inlined_call_operand.vmem [shape: f32[1,128], index: 2, kind: input, shape index: {}]
  %s3 = inlined_call_operand.hbm [shape: f32[128,128], index: 3, kind: input, shape index: {}]
  %s4 = inlined_call_operand.vmem [shape: f32[1,128], index: 4, kind: input, shape index: {}]
  %s5 = inlined_call_operand.hbm [shape: f32[8,128], index: 5, kind: output, shape index: {}]
  %s6 = sld [smem:[#allocation0]]
  $region50: #{tpu_custom_call.1} parent=0
    _
  %s8 = ssub.s32 1, %s6
  %s9 = scalar_select 0, %s8, %s6
  $region1: #{tpu_custom_call.1} parent=0
    #allocation3 [shape = 'u8[4096]{0}', space=vmem, size = 0x1000, scoped, tag = 'input window, operand 0, single buffered']
    #allocation4 [shape = 's32[1]{0}', space=sflag, size = 0x4, scoped, tag = 'scoped memory for tpu_custom_call.1']
    #allocation5 [shape = 's32[1]{0}', space=sflag, size = 0x4, scoped, tag = 'scoped memory for tpu_custom_call.1']
    #allocation6 [shape = 'u8[65536]{0}', space=vmem, size = 0x10000, scoped, tag = 'input window, operand 1, single buffered']
    #allocation7 [shape = 's32[1]{0}', space=sflag, size = 0x4, scoped, tag = 'scoped memory for tpu_custom_call.1']
    #allocation8 [shape = 'u8[65536]{0}', space=vmem, size = 0x10000, scoped, tag = 'input window, operand 3, single buffered']
    #allocation9 [shape = 'u8[4096]{0}', space=vmem, size = 0x1000, scoped, tag = 'output window, operand 0, single buffered']
    %10 = vsyncpa [#allocation4], 0
    %11 = vsyncpa [#allocation7], 0
    %12 = vsyncpa [#allocation5], 0
    // Predicated region
    $region2: #{tpu_custom_call.1} parent=1 // pred_check
      _
    $region3: #{tpu_custom_call.1} parent=1 // pred_check_branch
      %14 = sbr.rel (0) target = $region5
    $region4: #{tpu_custom_call.1} parent=1 // pred_region
      %16 = vsyncadd [#allocation4], 0
      %s18 = sshll.u32 %s0, 4
      %s19 = int_to_ptr.hbm [resolvable:$true] %s18
      %s20 = sshll.u32 [#allocation3], 4
      %s21 = int_to_ptr.vmem [resolvable:$true] %s20
      %23 = dma.hbm_to_vmem [thread:$0]  %s19, 128, %s21, [#allocation4]
    $region5: #{tpu_custom_call.1} parent=1 // pred_fallthru
      _
    // Predicated region
    $region6: #{tpu_custom_call.1} parent=1 // pred_check
      _
    $region7: #{tpu_custom_call.1} parent=1 // pred_check_branch
      %25 = sbr.rel (0) target = $region9
    $region8: #{tpu_custom_call.1} parent=1 // pred_region
      %27 = vsyncadd [#allocation7], 0
      %s28 = sshll.u32 %s1, 4
      %s29 = int_to_ptr.hbm [resolvable:$true] %s28
      %s30 = sshll.u32 [#allocation6], 4
      %s31 = int_to_ptr.vmem [resolvable:$true] %s30
      %36 = dma.hbm_to_vmem [thread:$0]  %s29, 2048, %s31, [#allocation7], 128, 128, 8
    $region9: #{tpu_custom_call.1} parent=1 // pred_fallthru
      _
    // Predicated region
    $region10: #{tpu_custom_call.1} parent=1 // pred_check
      _
    $region11: #{tpu_custom_call.1} parent=1 // pred_check_branch
      %38 = sbr.rel (0) target = $region13
    $region12: #{tpu_custom_call.1} parent=1 // pred_region
      _
    $region13: #{tpu_custom_call.1} parent=1 // pred_fallthru
      _
    // Predicated region
    $region14: #{tpu_custom_call.1} parent=1 // pred_check
      _
    $region15: #{tpu_custom_call.1} parent=1 // pred_check_branch
      %40 = sbr.rel (0) target = $region17
    $region16: #{tpu_custom_call.1} parent=1 // pred_region
      %42 = vsyncadd [#allocation7], 0
      %s43 = sshll.u32 %s3, 4
      %s44 = int_to_ptr.hbm [resolvable:$true] %s43
      %s45 = sshll.u32 [#allocation8], 4
      %s46 = int_to_ptr.vmem [resolvable:$true] %s45
      %51 = dma.hbm_to_vmem [thread:$0]  %s44, 2048, %s46, [#allocation7], 128, 128, 8
    $region17: #{tpu_custom_call.1} parent=1 // pred_fallthru
      _
    // Predicated region
    $region18: #{tpu_custom_call.1} parent=1 // pred_check
      _
    $region19: #{tpu_custom_call.1} parent=1 // pred_check_branch
      %53 = sbr.rel (0) target = $region21
    $region20: #{tpu_custom_call.1} parent=1 // pred_region
      _
    $region21: #{tpu_custom_call.1} parent=1 // pred_fallthru
      _
    // Predicated region
    $region22: #{tpu_custom_call.1} parent=1 // pred_check
      _
    $region23: #{tpu_custom_call.1} parent=1 // pred_check_branch
      %55 = sbr.rel (0) target = $region25
    $region24: #{tpu_custom_call.1} parent=1 // pred_region
      %57 = dma.done [#allocation4], 128
    $region25: #{tpu_custom_call.1} parent=1 // pred_fallthru
      _
    // Predicated region
    $region26: #{tpu_custom_call.1} parent=1 // pred_check
      _
    $region27: #{tpu_custom_call.1} parent=1 // pred_check_branch
      %59 = sbr.rel (0) target = $region29
    $region28: #{tpu_custom_call.1} parent=1 // pred_region
      %61 = dma.done [#allocation7], 2048
    $region29: #{tpu_custom_call.1} parent=1 // pred_fallthru
      _
    // Predicated region
    $region30: #{tpu_custom_call.1} parent=1 // pred_check
      _
    $region31: #{tpu_custom_call.1} parent=1 // pred_check_branch
      %63 = sbr.rel (0) target = $region33
    $region32: #{tpu_custom_call.1} parent=1 // pred_region
      %65 = dma.done [#allocation7], 2048
    $region33: #{tpu_custom_call.1} parent=1 // pred_fallthru
      _
    %p66 = scmp.eq.s32.totalorder 0, 0
    // Predicated region
    $region34: #{tpu_custom_call.1} parent=1 // pred_check
      %p67 = pneg %p66
    $region35: #{tpu_custom_call.1} parent=1 // pred_check_branch
      %69 = sbr.rel (%p67) target = $region37
    $region36: #{tpu_custom_call.1} parent=1 // pred_region
      %70 = vst [vmem:[#allocation2] sm:$0xff] 0.0
    $region37: #{tpu_custom_call.1} parent=1 // pred_fallthru
      _
    %v71 = vld [vmem:[#allocation3] sm:$0xff]
    %v72 = vld [vmem:[#allocation6] sm:$0xff]
    %v73 = vld [vmem:[#allocation6 + $0x8] sm:$0xff]
    %v74 = vld [vmem:[#allocation6 + $0x10] sm:$0xff]
    %v75 = vld [vmem:[#allocation6 + $0x18] sm:$0xff]
    %v76 = vld [vmem:[#allocation6 + $0x20] sm:$0xff]
    %v77 = vld [vmem:[#allocation6 + $0x28] sm:$0xff]
    %v78 = vld [vmem:[#allocation6 + $0x30] sm:$0xff]
    %v79 = vld [vmem:[#allocation6 + $0x38] sm:$0xff]
    %v80 = vld [vmem:[#allocation6 + $0x40] sm:$0xff]
    %v81 = vld [vmem:[#allocation6 + $0x48] sm:$0xff]
    %v82 = vld [vmem:[#allocation6 + $0x50] sm:$0xff]
    %v83 = vld [vmem:[#allocation6 + $0x58] sm:$0xff]
    %v84 = vld [vmem:[#allocation6 + $0x60] sm:$0xff]
    %v85 = vld [vmem:[#allocation6 + $0x68] sm:$0xff]
    %v86 = vld [vmem:[#allocation6 + $0x70] sm:$0xff]
    %v87 = vld [vmem:[#allocation6 + $0x78] sm:$0xff]
    %v88 = vld [vmem:[%s2] sm:$0x1]
    %v90 = vperm.slane %v88, 0
    %92 = vmatpush.msra.mxu0 %v87
    %93 = vmatpush.msra.mxu0 %v86
    %94 = vmatpush.msra.mxu0 %v85
    %95 = vmatpush.msra.mxu0 %v84
    %96 = vmatpush.msra.mxu0 %v83
    %97 = vmatpush.msra.mxu0 %v82
    %98 = vmatpush.msra.mxu0 %v81
    %99 = vmatpush.msra.mxu0 %v80
    %100 = vmatpush.msra.mxu0 %v79
    %101 = vmatpush.msra.mxu0 %v78
    %102 = vmatpush.msra.mxu0 %v77
    %103 = vmatpush.msra.mxu0 %v76
    %104 = vmatpush.msra.mxu0 %v75
    %105 = vmatpush.msra.mxu0 %v74
    %106 = vmatpush.msra.mxu0 %v73
    %107 = vmatpush.msra.mxu0 %v72
    %108 = vmatmul.f32.gmra.mxu0 %v71
    %v109 = vpop.f32.mrf.mxu0
    %v110 = vadd.f32 %v90, %v109
    %111 = vdwg.mxu0
    %v112 = vld [vmem:[#allocation2] sm:$0xff]
    %v113 = vld [vmem:[#allocation8] sm:$0xff]
    %v114 = vld [vmem:[#allocation8 + $0x8] sm:$0xff]
    %v115 = vld [vmem:[#allocation8 + $0x10] sm:$0xff]
    %v116 = vld [vmem:[#allocation8 + $0x18] sm:$0xff]
    %v117 = vld [vmem:[#allocation8 + $0x20] sm:$0xff]
    %v118 = vld [vmem:[#allocation8 + $0x28] sm:$0xff]
    %v119 = vld [vmem:[#allocation8 + $0x30] sm:$0xff]
    %v120 = vld [vmem:[#allocation8 + $0x38] sm:$0xff]
    %v121 = vld [vmem:[#allocation8 + $0x40] sm:$0xff]
    %v122 = vld [vmem:[#allocation8 + $0x48] sm:$0xff]
    %v123 = vld [vmem:[#allocation8 + $0x50] sm:$0xff]
    %v124 = vld [vmem:[#allocation8 + $0x58] sm:$0xff]
    %v125 = vld [vmem:[#allocation8 + $0x60] sm:$0xff]
    %v126 = vld [vmem:[#allocation8 + $0x68] sm:$0xff]
    %v127 = vld [vmem:[#allocation8 + $0x70] sm:$0xff]
    %v128 = vld [vmem:[#allocation8 + $0x78] sm:$0xff]
    %129 = vmatpush.msra.mxu0 %v128
    %130 = vmatpush.msra.mxu0 %v127
    %131 = vmatpush.msra.mxu0 %v126
    %132 = vmatpush.msra.mxu0 %v125
    %133 = vmatpush.msra.mxu0 %v124
    %134 = vmatpush.msra.mxu0 %v123
    %135 = vmatpush.msra.mxu0 %v122
    %136 = vmatpush.msra.mxu0 %v121
    %137 = vmatpush.msra.mxu0 %v120
    %138 = vmatpush.msra.mxu0 %v119
    %139 = vmatpush.msra.mxu0 %v118
    %140 = vmatpush.msra.mxu0 %v117
    %141 = vmatpush.msra.mxu0 %v116
    %142 = vmatpush.msra.mxu0 %v115
    %143 = vmatpush.msra.mxu0 %v114
    %144 = vmatpush.msra.mxu0 %v113
    %145 = vmatmul.f32.gmra.mxu0 %v110
    %v146 = vpop.f32.mrf.mxu0
    %v147 = vadd.f32 0.0, %v146
    %148 = vdwg.mxu0
    %v149 = vadd.f32 %v112, %v147
    %150 = vst [vmem:[#allocation2] sm:$0xff] %v149
    // Predicated region
    $region38: #{tpu_custom_call.1} parent=1 // pred_check
      %p151 = pneg %p66
    $region39: #{tpu_custom_call.1} parent=1 // pred_check_branch
      %153 = sbr.rel (%p151) target = $region41
    $region40: #{tpu_custom_call.1} parent=1 // pred_region
      %v154 = vld [vmem:[#allocation2] sm:$0xff]
      %v155 = vld [vmem:[%s4] sm:$0x1]
      %v157 = vperm.slane %v155, 0
      %v159 = vadd.f32 %v154, %v157
      %160 = vst [vmem:[#allocation9] sm:$0xff] %v159
    $region41: #{tpu_custom_call.1} parent=1 // pred_fallthru
      _
    // Predicated region
    $region42: #{tpu_custom_call.1} parent=1 // pred_check
      _
    $region43: #{tpu_custom_call.1} parent=1 // pred_check_branch
      %162 = sbr.rel (0) target = $region45
    $region44: #{tpu_custom_call.1} parent=1 // pred_region
      %164 = vsyncadd [#allocation5], 0
      %s166 = sshll.u32 [#allocation9], 4
      %s167 = int_to_ptr.vmem [resolvable:$true] %s166
      %s168 = sshll.u32 %s5, 4
      %s169 = int_to_ptr.hbm [resolvable:$true] %s168
      %171 = dma.vmem_to_hbm [thread:$0]  %s167, 128, %s169, [#allocation5]
    $region45: #{tpu_custom_call.1} parent=1 // pred_fallthru
      _
    // Predicated region
    $region46: #{tpu_custom_call.1} parent=1 // pred_check
      _
    $region47: #{tpu_custom_call.1} parent=1 // pred_check_branch
      %173 = sbr.rel (0) target = $region49
    $region48: #{tpu_custom_call.1} parent=1 // pred_region
      %175 = dma.done [#allocation5], 128
    $region49: #{tpu_custom_call.1} parent=1 // pred_fallthru
      _
    %176 = vsyncpa [#allocation4], 1
    %177 = vsyncpa [#allocation7], 1
    %178 = vsyncpa [#allocation5], 1

</llo_original>
